<compile_context>
chip_gen: v6e
topology: v6e:2x2x1
jax: 0.10.0
libtpu: 0.0.40
codegen_flags: <defaults>
</compile_context>

<pallas_src>
import jax
import jax.numpy as jnp
from jax import lax
from jax.experimental import pallas as pl
from jax.experimental.pallas import tpu as pltpu


def multitask_kernel(x_num_ref, cat_idx_ref, w_num_ref, w_emb_ref,
                     w_shared_ref, b_shared_ref, w_heads_ref, b_heads_ref,
                     out_ref):
    TB, Nn = x_num_ref.shape
    Nc = cat_idx_ref.shape[1]
    KV, C = w_emb_ref.shape            # KV = Nc * V  (flattened embedding rows)
    V = KV // Nc
    inv_cols = 1.0 / float(Nn + Nc)

    # --- categorical EmbeddingEncoder: flat one-hot over all columns -----------
    # One hoisted iota reused for every column (JAX does not CSE broadcast_in_dim).
    # Column j occupies the disjoint flat range [j*V, (j+1)*V), so summing the
    # per-column one-hots is exact and the whole encoder is ONE MXU matmul.
    iota_flat = lax.broadcasted_iota(jnp.int32, (TB, KV), 1)
    one_hot = (iota_flat == cat_idx_ref[:, 0:1]).astype(jnp.bfloat16)
    for j in range(1, Nc):                                   # Nc is small & static
        one_hot += (iota_flat == (cat_idx_ref[:, j:j + 1] + j * V)).astype(jnp.bfloat16)

    # --- fused encoder + mean over columns --------------------------------------
    # Categorical part on the MXU (bf16 operands, f32 accumulate). The numerical
    # LinearEncoder has K=Nn (tiny), so it is folded in as f32 VPU FMAs instead of
    # a nearly-empty MXU push (saves an MXU push and keeps that path full f32).
    pooled = jnp.dot(one_hot, w_emb_ref[...], preferred_element_type=jnp.float32)
    for i in range(Nn):                                      # Nn is small & static
        pooled += x_num_ref[:, i:i + 1] * w_num_ref[i:i + 1, :]
    pooled *= inv_cols                                                    # [TB, C]

    # --- shared layer (+ folded numerical-encoder bias) + ReLU, f32 elementwise --
    shared = jnp.dot(pooled.astype(jnp.bfloat16), w_shared_ref[...],
                     preferred_element_type=jnp.float32) + b_shared_ref[...]
    shared = jnp.maximum(shared, 0.0)                                     # [TB, C]

    # --- all task heads, lane-dense (padded to a multiple of 128), bf16 store ----
    logits = jnp.dot(shared.astype(jnp.bfloat16), w_heads_ref[...],
                     preferred_element_type=jnp.float32) + b_heads_ref[...]
    out_ref[...] = logits.astype(out_ref.dtype)


def init_params(key, *, channels, n_num, n_cat, vocab, target_config):
    ks = jax.random.split(key, 8)
    total_out = sum(
        1 if c["type"] in ("regression", "binary") else c["num_classes"]
        for c in target_config.values()
    )
    scale = 0.1
    return {
        # numerical LinearEncoder: per-column weight/bias of size [channels]
        "w_num": scale * jax.random.normal(ks[0], (n_num, channels), jnp.float32),
        "b_num": scale * jax.random.normal(ks[1], (n_num, channels), jnp.float32),
        # categorical EmbeddingEncoder: one [vocab, channels] table per column
        "emb": scale * jax.random.normal(ks[2], (n_cat, vocab, channels), jnp.float32),
        # shared Linear(channels, channels)
        "w_shared": scale * jax.random.normal(ks[3], (channels, channels), jnp.float32),
        "b_shared": scale * jax.random.normal(ks[4], (1, channels), jnp.float32),
        # all output heads concatenated: Linear(channels, total_out)
        "w_heads": scale * jax.random.normal(ks[5], (channels, total_out), jnp.float32),
        "b_heads": scale * jax.random.normal(ks[6], (1, total_out), jnp.float32),
    }


def prepare_params(params):
    """One-time parameter preprocessing (bias folding, flattening, bf16 cast, lane pad)."""
    n_num, C = params["w_num"].shape
    n_cat, V, _ = params["emb"].shape
    num_cols = n_num + n_cat
    total_out = params["w_heads"].shape[1]
    out_pad = pl.cdiv(total_out, 128) * 128           # lane-dense head output

    # Fold the batch-constant numerical-encoder bias through the shared layer.
    bias_pooled = jnp.sum(params["b_num"], axis=0, keepdims=True) / num_cols   # [1, C]
    b_shared_eff = params["b_shared"] + bias_pooled @ params["w_shared"]       # [1, C] f32

    return {
        "w_num": params["w_num"],                                               # [Nn, C] f32 (VPU path)
        "w_emb": params["emb"].reshape(n_cat * V, C).astype(jnp.bfloat16),      # [Nc*V, C]
        "w_shared": params["w_shared"].astype(jnp.bfloat16),                    # [C, C]
        "b_shared": b_shared_eff,                                               # [1, C] f32
        "w_heads": jnp.pad(params["w_heads"],
                           ((0, 0), (0, out_pad - total_out))).astype(jnp.bfloat16),
        "b_heads": jnp.pad(params["b_heads"], ((0, 0), (0, out_pad - total_out))),
        "total_out": total_out,
        "out_pad": out_pad,
        "n_cat": n_cat,
        "vocab": V,
    }


def _choose_batch_tiling(B):
    """Pick an 8-aligned batch tile: ~512-row tiles to amortize the ~0.35us per-grid-step
    overhead, >=2 tiles when the batch allows it (so ("parallel",) shards across v7x's two
    TensorCores), and an even split so remainder padding is at most 7 rows per tile."""
    B8 = pl.cdiv(B, 8) * 8
    TB_TARGET = 512
    TB_MIN_SPLIT = 256           # don't split below this many rows per tile
    n_tiles = pl.cdiv(B8, TB_TARGET)
    if n_tiles < 2 and B8 >= 2 * TB_MIN_SPLIT:
        n_tiles = 2
    TB = pl.cdiv(pl.cdiv(B8, n_tiles), 8) * 8
    return TB, TB * n_tiles


def _vmem_limit_bytes(TB, Nn, Nc, KV, C, out_pad):
    """Conservative scoped-VMEM request: resident weights (x2 in case the single-buffer
    request falls back), double-buffered activation tiles, in-kernel intermediates."""
    weights = (Nn * C * 4 + KV * C * 2 + C * C * 2 + C * 4 + C * out_pad * 2 + out_pad * 4)
    act_tiles = TB * (Nn * 4 + Nc * 4 + out_pad * 2)
    scratch = TB * (KV * (4 + 2) + 6 * C * 4 + out_pad * 4)   # iota + one-hot + f32 temps
    est = 2 * weights + 2 * act_tiles + scratch
    return int(min(64 << 20, max(32 << 20, 2 * est)))


def _build_call(TB, B_pad, Nn, Nc, prepped, out_pad, single_buffer_weights):
    KV, C = prepped["w_emb"].shape
    batch_map = lambda i: (i, 0)
    const_map = lambda i: (0, 0)
    # Weights never change block index -> a single VMEM buffer is enough.
    wkw = {"pipeline_mode": pl.Buffered(1)} if single_buffer_weights else {}

    flops = 2 * B_pad * (KV * C + Nn * C + C * C + C * out_pad)
    bytes_accessed = (B_pad * (Nn * 4 + Nc * 4 + out_pad * 2)
                      + Nn * C * 4 + KV * C * 2 + C * C * 2 + C * 4
                      + C * out_pad * 2 + out_pad * 4)

    return pl.pallas_call(
        multitask_kernel,
        out_shape=jax.ShapeDtypeStruct((B_pad, out_pad), jnp.bfloat16),
        grid_spec=pltpu.PrefetchScalarGridSpec(
            num_scalar_prefetch=0,
            grid=(B_pad // TB,),
            in_specs=[
                pl.BlockSpec((TB, Nn), batch_map),                        # x_num tile
                pl.BlockSpec((TB, Nc), batch_map),                        # cat_idx tile
                pl.BlockSpec(prepped["w_num"].shape, const_map, **wkw),   # resident weights
                pl.BlockSpec(prepped["w_emb"].shape, const_map, **wkw),
                pl.BlockSpec(prepped["w_shared"].shape, const_map, **wkw),
                pl.BlockSpec(prepped["b_shared"].shape, const_map, **wkw),
                pl.BlockSpec(prepped["w_heads"].shape, const_map, **wkw),
                pl.BlockSpec(prepped["b_heads"].shape, const_map, **wkw),
            ],
            out_specs=pl.BlockSpec((TB, out_pad), batch_map),
        ),
        compiler_params=pltpu.CompilerParams(
            dimension_semantics=("parallel",),        # v7x: shard batch tiles over 2 TCs
            vmem_limit_bytes=_vmem_limit_bytes(TB, Nn, Nc, KV, C, out_pad)),
        cost_estimate=pl.CostEstimate(
            flops=flops, transcendentals=0, bytes_accessed=bytes_accessed),
    )


def simple_multitask_forward(x_num, cat_idx, prepped, target_config):
    B, Nn = x_num.shape
    Nc = cat_idx.shape[1]
    V = prepped["vocab"]
    out_pad = prepped["out_pad"]
    total_out = prepped["total_out"]

    # pytorch_frame encodes missing categoricals as -1; in the flat one-hot that would
    # alias into the previous column's embedding range, so clip to a valid row.
    cat_idx = jnp.clip(cat_idx, 0, V - 1).astype(jnp.int32)

    TB, B_pad = _choose_batch_tiling(B)
    if B_pad != B:
        x_num = jnp.pad(x_num, ((0, B_pad - B), (0, 0)))
        cat_idx = jnp.pad(cat_idx, ((0, B_pad - B), (0, 0)))

    args = (x_num, cat_idx, prepped["w_num"], prepped["w_emb"], prepped["w_shared"],
            prepped["b_shared"], prepped["w_heads"], prepped["b_heads"])
    try:
        logits = _build_call(TB, B_pad, Nn, Nc, prepped, out_pad,
                             single_buffer_weights=True)(*args)
    except Exception:
        # pipeline_mode=pl.Buffered(1) rejected on this jax version/backend:
        # fall back to default (double-buffered) weight blocks.
        logits = _build_call(TB, B_pad, Nn, Nc, prepped, out_pad,
                             single_buffer_weights=False)(*args)

    # Split concatenated (lane-padded, bf16) head outputs into the per-task dict (glue).
    outputs = {}
    off = 0
    for task_name, config in target_config.items():
        n = 1 if config["type"] in ("regression", "binary") else config["num_classes"]
        pred = logits[:B, off:off + n].astype(jnp.float32)
        if config["type"] == "regression":
            pred = pred[:, 0]          # squeeze(-1)
        outputs[task_name] = pred
        off += n
    assert off == total_out
    return outputs


def reference_forward(x_num, cat_idx, params, target_config):
    """Pure-JAX reference matching the PyTorch module (f32)."""
    n_cat = params["emb"].shape[0]
    num_enc = x_num[:, :, None] * params["w_num"][None] + params["b_num"][None]   # [B,Nn,C]
    cat_enc = jnp.stack([params["emb"][j][cat_idx[:, j]] for j in range(n_cat)],
                        axis=1)                                                    # [B,Nc,C]
    x = jnp.concatenate([num_enc, cat_enc], axis=1)
    pooled = x.mean(axis=1)
    shared = jax.nn.relu(pooled @ params["w_shared"] + params["b_shared"])
    logits = shared @ params["w_heads"] + params["b_heads"]
    outputs, off = {}, 0
    for task_name, config in target_config.items():
        n = 1 if config["type"] in ("regression", "binary") else config["num_classes"]
        pred = logits[:, off:off + n]
        if config["type"] == "regression":
            pred = pred[:, 0]
        outputs[task_name] = pred
        off += n
    return outputs


if __name__ == "__main__":
    B, C = 8, 32          # batch, channels
    N_NUM, N_CAT = 3, 2   # numerical / categorical columns
    VOCAB = 16            # categorical vocabulary size

    target_config = {
        "price": {"type": "regression"},
        "clicked": {"type": "binary"},
        "category": {"type": "multiclass", "num_classes": 3},
    }

    key = jax.random.PRNGKey(0)
    k_par, k_x, k_c = jax.random.split(key, 3)

    params = init_params(k_par, channels=C, n_num=N_NUM, n_cat=N_CAT,
                         vocab=VOCAB, target_config=target_config)
    prepped = prepare_params(params)

    x_num = jax.random.normal(k_x, (B, N_NUM), jnp.float32)
    cat_idx = jax.random.randint(k_c, (B, N_CAT), 0, VOCAB, jnp.int32)

    outputs = simple_multitask_forward(x_num, cat_idx, prepped, target_config)
    jax.block_until_ready(outputs)

    assert outputs["price"].shape == (B,)
    assert outputs["clicked"].shape == (B, 1)
    assert outputs["category"].shape == (B, 3)

    # Numerical check against the pure-f32 reference (bf16 MXU operands + bf16 output).
    ref = reference_forward(x_num, cat_idx, params, target_config)
    for name in target_config:
        assert jnp.allclose(outputs[name], ref[name], atol=2e-2, rtol=2e-2), name

    print("KERNEL_OK")
</pallas_src>

<mosaic_0001>
module attributes {stable_mosaic.version = 11 : i64} {
  func.func @multitask_kernel(%arg0: i32, %arg1: memref<8x3xf32, #tpu.memory_space<vmem>>, %arg2: memref<8x2xi32, #tpu.memory_space<vmem>>, %arg3: memref<3x32xf32, #tpu.memory_space<vmem>>, %arg4: memref<32x32xbf16, #tpu.memory_space<vmem>>, %arg5: memref<32x32xbf16, #tpu.memory_space<vmem>>, %arg6: memref<1x32xf32, #tpu.memory_space<vmem>>, %arg7: memref<32x128xbf16, #tpu.memory_space<vmem>>, %arg8: memref<1x128xf32, #tpu.memory_space<vmem>>, %arg9: memref<8x128xbf16, #tpu.memory_space<vmem>>) attributes {dimension_semantics = [#tpu.dimension_semantics<parallel>], iteration_bounds = array<i64: 1>, scalar_prefetch = 0 : i64, scratch_operands = 0 : i64, tpu.core_type = #tpu.core_type<tc>, window_params = [{transform_indices = @transform_0, window_bounds = array<i64: 8, 3>}, {transform_indices = @transform_1, window_bounds = array<i64: 8, 2>}, {pipeline_mode = #tpu.pipeline_mode<synchronous>, transform_indices = @transform_2, window_bounds = array<i64: 3, 32>}, {pipeline_mode = #tpu.pipeline_mode<synchronous>, transform_indices = @transform_3, window_bounds = array<i64: 32, 32>}, {pipeline_mode = #tpu.pipeline_mode<synchronous>, transform_indices = @transform_4, window_bounds = array<i64: 32, 32>}, {pipeline_mode = #tpu.pipeline_mode<synchronous>, transform_indices = @transform_5, window_bounds = array<i64: 1, 32>}, {pipeline_mode = #tpu.pipeline_mode<synchronous>, transform_indices = @transform_6, window_bounds = array<i64: 32, 128>}, {pipeline_mode = #tpu.pipeline_mode<synchronous>, transform_indices = @transform_7, window_bounds = array<i64: 1, 128>}, {transform_indices = @transform_8, window_bounds = array<i64: 8, 128>}]} {
    %0 = tpu.iota {dimensions = array<i32: 1>} : vector<8x32xi32>
    %c0 = arith.constant 0 : index
    %c0_0 = arith.constant 0 : index
    %1 = vector.load %arg2[%c0, %c0_0] : memref<8x2xi32, #tpu.memory_space<vmem>>, vector<8x1xi32>
    %2 = vector.broadcast %1 : vector<8x1xi32> to vector<8x32xi32>
    %3 = arith.cmpi eq, %0, %2 : vector<8x32xi32>
    %4 = arith.extui %3 : vector<8x32xi1> to vector<8x32xi32>
    %5 = arith.sitofp %4 : vector<8x32xi32> to vector<8x32xf32>
    %6 = arith.truncf %5 : vector<8x32xf32> to vector<8x32xbf16>
    %c0_1 = arith.constant 0 : index
    %c1 = arith.constant 1 : index
    %7 = vector.load %arg2[%c0_1, %c1] : memref<8x2xi32, #tpu.memory_space<vmem>>, vector<8x1xi32>
    %c16_i32 = arith.constant 16 : i32
    %8 = vector.broadcast %c16_i32 : i32 to vector<8x1xi32>
    %9 = arith.addi %7, %8 : vector<8x1xi32>
    %10 = vector.broadcast %9 : vector<8x1xi32> to vector<8x32xi32>
    %11 = arith.cmpi eq, %0, %10 : vector<8x32xi32>
    %12 = arith.extui %11 : vector<8x32xi1> to vector<8x32xi32>
    %13 = arith.sitofp %12 : vector<8x32xi32> to vector<8x32xf32>
    %14 = arith.truncf %13 : vector<8x32xf32> to vector<8x32xbf16>
    %15 = arith.addf %6, %14 : vector<8x32xbf16>
    %c0_2 = arith.constant 0 : index
    %c0_3 = arith.constant 0 : index
    %16 = vector.load %arg4[%c0_2, %c0_3] : memref<32x32xbf16, #tpu.memory_space<vmem>>, vector<32x32xbf16>
    %cst = arith.constant dense<0.000000e+00> : vector<8x32xf32>
    %17 = tpu.matmul %15, %16, %cst {dimension_numbers = #tpu.dot_dimension_numbers<[1], [0], [0], [1], [0, 0, 1, 1], [], []>} : vector<8x32xbf16>, vector<32x32xbf16>, vector<8x32xf32> -> vector<8x32xf32>
    %c0_4 = arith.constant 0 : index
    %c0_5 = arith.constant 0 : index
    %18 = vector.load %arg1[%c0_4, %c0_5] : memref<8x3xf32, #tpu.memory_space<vmem>>, vector<8x1xf32>
    %c0_6 = arith.constant 0 : index
    %c0_7 = arith.constant 0 : index
    %19 = vector.load %arg3[%c0_6, %c0_7] : memref<3x32xf32, #tpu.memory_space<vmem>>, vector<1x32xf32>
    %20 = vector.broadcast %18 : vector<8x1xf32> to vector<8x32xf32>
    %21 = vector.broadcast %19 : vector<1x32xf32> to vector<8x32xf32>
    %22 = arith.mulf %20, %21 : vector<8x32xf32>
    %23 = arith.addf %17, %22 : vector<8x32xf32>
    %c0_8 = arith.constant 0 : index
    %c1_9 = arith.constant 1 : index
    %24 = vector.load %arg1[%c0_8, %c1_9] : memref<8x3xf32, #tpu.memory_space<vmem>>, vector<8x1xf32>
    %c1_10 = arith.constant 1 : index
    %c0_11 = arith.constant 0 : index
    %25 = vector.load %arg3[%c1_10, %c0_11] : memref<3x32xf32, #tpu.memory_space<vmem>>, vector<1x32xf32>
    %26 = vector.broadcast %24 : vector<8x1xf32> to vector<8x32xf32>
    %27 = vector.broadcast %25 : vector<1x32xf32> to vector<8x32xf32>
    %28 = arith.mulf %26, %27 : vector<8x32xf32>
    %29 = arith.addf %23, %28 : vector<8x32xf32>
    %c0_12 = arith.constant 0 : index
    %c2 = arith.constant 2 : index
    %30 = vector.load %arg1[%c0_12, %c2] : memref<8x3xf32, #tpu.memory_space<vmem>>, vector<8x1xf32>
    %c2_13 = arith.constant 2 : index
    %c0_14 = arith.constant 0 : index
    %31 = vector.load %arg3[%c2_13, %c0_14] : memref<3x32xf32, #tpu.memory_space<vmem>>, vector<1x32xf32>
    %32 = vector.broadcast %30 : vector<8x1xf32> to vector<8x32xf32>
    %33 = vector.broadcast %31 : vector<1x32xf32> to vector<8x32xf32>
    %34 = arith.mulf %32, %33 : vector<8x32xf32>
    %35 = arith.addf %29, %34 : vector<8x32xf32>
    %cst_15 = arith.constant 2.000000e-01 : f32
    %36 = vector.broadcast %cst_15 : f32 to vector<8x32xf32>
    %37 = arith.mulf %35, %36 : vector<8x32xf32>
    %38 = arith.truncf %37 : vector<8x32xf32> to vector<8x32xbf16>
    %c0_16 = arith.constant 0 : index
    %c0_17 = arith.constant 0 : index
    %39 = vector.load %arg5[%c0_16, %c0_17] : memref<32x32xbf16, #tpu.memory_space<vmem>>, vector<32x32xbf16>
    %cst_18 = arith.constant dense<0.000000e+00> : vector<8x32xf32>
    %40 = tpu.matmul %38, %39, %cst_18 {dimension_numbers = #tpu.dot_dimension_numbers<[1], [0], [0], [1], [0, 0, 1, 1], [], []>} : vector<8x32xbf16>, vector<32x32xbf16>, vector<8x32xf32> -> vector<8x32xf32>
    %c0_19 = arith.constant 0 : index
    %c0_20 = arith.constant 0 : index
    %41 = vector.load %arg6[%c0_19, %c0_20] : memref<1x32xf32, #tpu.memory_space<vmem>>, vector<1x32xf32>
    %42 = vector.broadcast %41 : vector<1x32xf32> to vector<8x32xf32>
    %43 = arith.addf %40, %42 : vector<8x32xf32>
    %cst_21 = arith.constant 0.000000e+00 : f32
    %44 = vector.broadcast %cst_21 : f32 to vector<8x32xf32>
    %45 = arith.maximumf %43, %44 : vector<8x32xf32>
    %46 = arith.truncf %45 : vector<8x32xf32> to vector<8x32xbf16>
    %c0_22 = arith.constant 0 : index
    %c0_23 = arith.constant 0 : index
    %47 = vector.load %arg7[%c0_22, %c0_23] : memref<32x128xbf16, #tpu.memory_space<vmem>>, vector<32x128xbf16>
    %cst_24 = arith.constant dense<0.000000e+00> : vector<8x128xf32>
    %48 = tpu.matmul %46, %47, %cst_24 {dimension_numbers = #tpu.dot_dimension_numbers<[1], [0], [0], [1], [0, 0, 1, 1], [], []>} : vector<8x32xbf16>, vector<32x128xbf16>, vector<8x128xf32> -> vector<8x128xf32>
    %c0_25 = arith.constant 0 : index
    %c0_26 = arith.constant 0 : index
    %49 = vector.load %arg8[%c0_25, %c0_26] : memref<1x128xf32, #tpu.memory_space<vmem>>, vector<1x128xf32>
    %50 = vector.broadcast %49 : vector<1x128xf32> to vector<8x128xf32>
    %51 = arith.addf %48, %50 : vector<8x128xf32>
    %52 = arith.truncf %51 : vector<8x128xf32> to vector<8x128xbf16>
    %c0_27 = arith.constant 0 : index
    %c0_28 = arith.constant 0 : index
    %53 = vector.load %arg9[%c0_27, %c0_28] : memref<8x128xbf16, #tpu.memory_space<vmem>>, vector<8x128xbf16>
    tpu.vector_store %arg9[%c0_27, %c0_28], %52 {strides = array<i32>} : memref<8x128xbf16, #tpu.memory_space<vmem>>, vector<8x128xbf16>,
    return
  }
  func.func @transform_0(%arg0: i32) -> (i32, i32) {
    %c0_i32 = arith.constant 0 : i32
    %c0_i32_0 = arith.constant 0 : i32
    return %arg0, %c0_i32 : i32, i32
  }
  func.func @transform_1(%arg0: i32) -> (i32, i32) {
    %c0_i32 = arith.constant 0 : i32
    %c0_i32_0 = arith.constant 0 : i32
    return %arg0, %c0_i32 : i32, i32
  }
  func.func @transform_2(%arg0: i32) -> (i32, i32) {
    %c0_i32 = arith.constant 0 : i32
    %c0_i32_0 = arith.constant 0 : i32
    %c0_i32_1 = arith.constant 0 : i32
    return %c0_i32, %c0_i32_0 : i32, i32
  }
  func.func @transform_3(%arg0: i32) -> (i32, i32) {
    %c0_i32 = arith.constant 0 : i32
    %c0_i32_0 = arith.constant 0 : i32
    %c0_i32_1 = arith.constant 0 : i32
    return %c0_i32, %c0_i32_0 : i32, i32
  }
  func.func @transform_4(%arg0: i32) -> (i32, i32) {
    %c0_i32 = arith.constant 0 : i32
    %c0_i32_0 = arith.constant 0 : i32
    %c0_i32_1 = arith.constant 0 : i32
    return %c0_i32, %c0_i32_0 : i32, i32
  }
  func.func @transform_5(%arg0: i32) -> (i32, i32) {
    %c0_i32 = arith.constant 0 : i32
    %c0_i32_0 = arith.constant 0 : i32
    %c0_i32_1 = arith.constant 0 : i32
    return %c0_i32, %c0_i32_0 : i32, i32
  }
  func.func @transform_6(%arg0: i32) -> (i32, i32) {
    %c0_i32 = arith.constant 0 : i32
    %c0_i32_0 = arith.constant 0 : i32
    %c0_i32_1 = arith.constant 0 : i32
    return %c0_i32, %c0_i32_0 : i32, i32
  }
  func.func @transform_7(%arg0: i32) -> (i32, i32) {
    %c0_i32 = arith.constant 0 : i32
    %c0_i32_0 = arith.constant 0 : i32
    %c0_i32_1 = arith.constant 0 : i32
    return %c0_i32, %c0_i32_0 : i32, i32
  }
  func.func @transform_8(%arg0: i32) -> (i32, i32) {
    %c0_i32 = arith.constant 0 : i32
    %c0_i32_0 = arith.constant 0 : i32
    return %arg0, %c0_i32 : i32, i32
  }
}

module attributes {stable_mosaic.version = 11 : i64} {
  func.func @multitask_kernel(%arg0: i32, %arg1: memref<8x3xf32, #tpu.memory_space<vmem>>, %arg2: memref<8x2xi32, #tpu.memory_space<vmem>>, %arg3: memref<3x32xf32, #tpu.memory_space<vmem>>, %arg4: memref<32x32xbf16, #tpu.memory_space<vmem>>, %arg5: memref<32x32xbf16, #tpu.memory_space<vmem>>, %arg6: memref<1x32xf32, #tpu.memory_space<vmem>>, %arg7: memref<32x128xbf16, #tpu.memory_space<vmem>>, %arg8: memref<1x128xf32, #tpu.memory_space<vmem>>, %arg9: memref<8x128xbf16, #tpu.memory_space<vmem>>) attributes {dimension_semantics = [#tpu.dimension_semantics<parallel>], iteration_bounds = array<i64: 1>, scalar_prefetch = 0 : i64, scratch_operands = 0 : i64, tpu.core_type = #tpu.core_type<tc>, window_params = [{transform_indices = @transform_0, window_bounds = array<i64: 8, 3>}, {transform_indices = @transform_1, window_bounds = array<i64: 8, 2>}, {pipeline_mode = #tpu.pipeline_mode<synchronous>, transform_indices = @transform_2, window_bounds = array<i64: 3, 32>}, {pipeline_mode = #tpu.pipeline_mode<synchronous>, transform_indices = @transform_3, window_bounds = array<i64: 32, 32>}, {pipeline_mode = #tpu.pipeline_mode<synchronous>, transform_indices = @transform_4, window_bounds = array<i64: 32, 32>}, {pipeline_mode = #tpu.pipeline_mode<synchronous>, transform_indices = @transform_5, window_bounds = array<i64: 1, 32>}, {pipeline_mode = #tpu.pipeline_mode<synchronous>, transform_indices = @transform_6, window_bounds = array<i64: 32, 128>}, {pipeline_mode = #tpu.pipeline_mode<synchronous>, transform_indices = @transform_7, window_bounds = array<i64: 1, 128>}, {transform_indices = @transform_8, window_bounds = array<i64: 8, 128>}]} {
    %0 = tpu.iota {dimensions = array<i32: 1>} : vector<8x32xi32>
    %c0 = arith.constant 0 : index
    %c0_0 = arith.constant 0 : index
    %1 = vector.load %arg2[%c0, %c0_0] : memref<8x2xi32, #tpu.memory_space<vmem>>, vector<8x1xi32>
    %2 = vector.broadcast %1 : vector<8x1xi32> to vector<8x32xi32>
    %3 = arith.cmpi eq, %0, %2 : vector<8x32xi32>
    %4 = arith.extui %3 : vector<8x32xi1> to vector<8x32xi32>
    %5 = arith.sitofp %4 : vector<8x32xi32> to vector<8x32xf32>
    %6 = arith.truncf %5 : vector<8x32xf32> to vector<8x32xbf16>
    %c0_1 = arith.constant 0 : index
    %c1 = arith.constant 1 : index
    %7 = vector.load %arg2[%c0_1, %c1] : memref<8x2xi32, #tpu.memory_space<vmem>>, vector<8x1xi32>
    %c16_i32 = arith.constant 16 : i32
    %8 = vector.broadcast %c16_i32 : i32 to vector<8x1xi32>
    %9 = arith.addi %7, %8 : vector<8x1xi32>
    %10 = vector.broadcast %9 : vector<8x1xi32> to vector<8x32xi32>
    %11 = arith.cmpi eq, %0, %10 : vector<8x32xi32>
    %12 = arith.extui %11 : vector<8x32xi1> to vector<8x32xi32>
    %13 = arith.sitofp %12 : vector<8x32xi32> to vector<8x32xf32>
    %14 = arith.truncf %13 : vector<8x32xf32> to vector<8x32xbf16>
    %15 = arith.addf %6, %14 : vector<8x32xbf16>
    %c0_2 = arith.constant 0 : index
    %c0_3 = arith.constant 0 : index
    %16 = vector.load %arg4[%c0_2, %c0_3] : memref<32x32xbf16, #tpu.memory_space<vmem>>, vector<32x32xbf16>
    %cst = arith.constant dense<0.000000e+00> : vector<8x32xf32>
    %17 = tpu.matmul %15, %16, %cst {dimension_numbers = #tpu.dot_dimension_numbers<[1], [0], [0], [1], [0, 0, 1, 1], [], []>} : vector<8x32xbf16>, vector<32x32xbf16>, vector<8x32xf32> -> vector<8x32xf32>
    %c0_4 = arith.constant 0 : index
    %c0_5 = arith.constant 0 : index
    %18 = vector.load %arg1[%c0_4, %c0_5] : memref<8x3xf32, #tpu.memory_space<vmem>>, vector<8x1xf32>
    %c0_6 = arith.constant 0 : index
    %c0_7 = arith.constant 0 : index
    %19 = vector.load %arg3[%c0_6, %c0_7] : memref<3x32xf32, #tpu.memory_space<vmem>>, vector<1x32xf32>
    %20 = vector.broadcast %18 : vector<8x1xf32> to vector<8x32xf32>
    %21 = vector.broadcast %19 : vector<1x32xf32> to vector<8x32xf32>
    %22 = arith.mulf %20, %21 : vector<8x32xf32>
    %23 = arith.addf %17, %22 : vector<8x32xf32>
    %c0_8 = arith.constant 0 : index
    %c1_9 = arith.constant 1 : index
    %24 = vector.load %arg1[%c0_8, %c1_9] : memref<8x3xf32, #tpu.memory_space<vmem>>, vector<8x1xf32>
    %c1_10 = arith.constant 1 : index
    %c0_11 = arith.constant 0 : index
    %25 = vector.load %arg3[%c1_10, %c0_11] : memref<3x32xf32, #tpu.memory_space<vmem>>, vector<1x32xf32>
    %26 = vector.broadcast %24 : vector<8x1xf32> to vector<8x32xf32>
    %27 = vector.broadcast %25 : vector<1x32xf32> to vector<8x32xf32>
    %28 = arith.mulf %26, %27 : vector<8x32xf32>
    %29 = arith.addf %23, %28 : vector<8x32xf32>
    %c0_12 = arith.constant 0 : index
    %c2 = arith.constant 2 : index
    %30 = vector.load %arg1[%c0_12, %c2] : memref<8x3xf32, #tpu.memory_space<vmem>>, vector<8x1xf32>
    %c2_13 = arith.constant 2 : index
    %c0_14 = arith.constant 0 : index
    %31 = vector.load %arg3[%c2_13, %c0_14] : memref<3x32xf32, #tpu.memory_space<vmem>>, vector<1x32xf32>
    %32 = vector.broadcast %30 : vector<8x1xf32> to vector<8x32xf32>
    %33 = vector.broadcast %31 : vector<1x32xf32> to vector<8x32xf32>
    %34 = arith.mulf %32, %33 : vector<8x32xf32>
    %35 = arith.addf %29, %34 : vector<8x32xf32>
    %cst_15 = arith.constant 2.000000e-01 : f32
    %36 = vector.broadcast %cst_15 : f32 to vector<8x32xf32>
    %37 = arith.mulf %35, %36 : vector<8x32xf32>
    %38 = arith.truncf %37 : vector<8x32xf32> to vector<8x32xbf16>
    %c0_16 = arith.constant 0 : index
    %c0_17 = arith.constant 0 : index
    %39 = vector.load %arg5[%c0_16, %c0_17] : memref<32x32xbf16, #tpu.memory_space<vmem>>, vector<32x32xbf16>
    %cst_18 = arith.constant dense<0.000000e+00> : vector<8x32xf32>
    %40 = tpu.matmul %38, %39, %cst_18 {dimension_numbers = #tpu.dot_dimension_numbers<[1], [0], [0], [1], [0, 0, 1, 1], [], []>} : vector<8x32xbf16>, vector<32x32xbf16>, vector<8x32xf32> -> vector<8x32xf32>
    %c0_19 = arith.constant 0 : index
    %c0_20 = arith.constant 0 : index
    %41 = vector.load %arg6[%c0_19, %c0_20] : memref<1x32xf32, #tpu.memory_space<vmem>>, vector<1x32xf32>
    %42 = vector.broadcast %41 : vector<1x32xf32> to vector<8x32xf32>
    %43 = arith.addf %40, %42 : vector<8x32xf32>
    %cst_21 = arith.constant 0.000000e+00 : f32
    %44 = vector.broadcast %cst_21 : f32 to vector<8x32xf32>
    %45 = arith.maximumf %43, %44 : vector<8x32xf32>
    %46 = arith.truncf %45 : vector<8x32xf32> to vector<8x32xbf16>
    %c0_22 = arith.constant 0 : index
    %c0_23 = arith.constant 0 : index
    %47 = vector.load %arg7[%c0_22, %c0_23] : memref<32x128xbf16, #tpu.memory_space<vmem>>, vector<32x128xbf16>
    %cst_24 = arith.constant dense<0.000000e+00> : vector<8x128xf32>
    %48 = tpu.matmul %46, %47, %cst_24 {dimension_numbers = #tpu.dot_dimension_numbers<[1], [0], [0], [1], [0, 0, 1, 1], [], []>} : vector<8x32xbf16>, vector<32x128xbf16>, vector<8x128xf32> -> vector<8x128xf32>
    %c0_25 = arith.constant 0 : index
    %c0_26 = arith.constant 0 : index
    %49 = vector.load %arg8[%c0_25, %c0_26] : memref<1x128xf32, #tpu.memory_space<vmem>>, vector<1x128xf32>
    %50 = vector.broadcast %49 : vector<1x128xf32> to vector<8x128xf32>
    %51 = arith.addf %48, %50 : vector<8x128xf32>
    %52 = arith.truncf %51 : vector<8x128xf32> to vector<8x128xbf16>
    %c0_27 = arith.constant 0 : index
    %c0_28 = arith.constant 0 : index
    %53 = vector.load %arg9[%c0_27, %c0_28] : memref<8x128xbf16, #tpu.memory_space<vmem>>, vector<8x128xbf16>
    tpu.vector_store %arg9[%c0_27, %c0_28], %52 {strides = array<i32>} : memref<8x128xbf16, #tpu.memory_space<vmem>>, vector<8x128xbf16>,
    return
  }
  func.func @transform_0(%arg0: i32) -> (i32, i32) {
    %c0_i32 = arith.constant 0 : i32
    %c0_i32_0 = arith.constant 0 : i32
    return %arg0, %c0_i32 : i32, i32
  }
  func.func @transform_1(%arg0: i32) -> (i32, i32) {
    %c0_i32 = arith.constant 0 : i32
    %c0_i32_0 = arith.constant 0 : i32
    return %arg0, %c0_i32 : i32, i32
  }
  func.func @transform_2(%arg0: i32) -> (i32, i32) {
    %c0_i32 = arith.constant 0 : i32
    %c0_i32_0 = arith.constant 0 : i32
    %c0_i32_1 = arith.constant 0 : i32
    return %c0_i32, %c0_i32_0 : i32, i32
  }
  func.func @transform_3(%arg0: i32) -> (i32, i32) {
    %c0_i32 = arith.constant 0 : i32
    %c0_i32_0 = arith.constant 0 : i32
    %c0_i32_1 = arith.constant 0 : i32
    return %c0_i32, %c0_i32_0 : i32, i32
  }
  func.func @transform_4(%arg0: i32) -> (i32, i32) {
    %c0_i32 = arith.constant 0 : i32
    %c0_i32_0 = arith.constant 0 : i32
    %c0_i32_1 = arith.constant 0 : i32
    return %c0_i32, %c0_i32_0 : i32, i32
  }
  func.func @transform_5(%arg0: i32) -> (i32, i32) {
    %c0_i32 = arith.constant 0 : i32
    %c0_i32_0 = arith.constant 0 : i32
    %c0_i32_1 = arith.constant 0 : i32
    return %c0_i32, %c0_i32_0 : i32, i32
  }
  func.func @transform_6(%arg0: i32) -> (i32, i32) {
    %c0_i32 = arith.constant 0 : i32
    %c0_i32_0 = arith.constant 0 : i32
    %c0_i32_1 = arith.constant 0 : i32
    return %c0_i32, %c0_i32_0 : i32, i32
  }
  func.func @transform_7(%arg0: i32) -> (i32, i32) {
    %c0_i32 = arith.constant 0 : i32
    %c0_i32_0 = arith.constant 0 : i32
    %c0_i32_1 = arith.constant 0 : i32
    return %c0_i32, %c0_i32_0 : i32, i32
  }
  func.func @transform_8(%arg0: i32) -> (i32, i32) {
    %c0_i32 = arith.constant 0 : i32
    %c0_i32_0 = arith.constant 0 : i32
    return %arg0, %c0_i32 : i32, i32
  }
}

</mosaic_0001>

<llo_original>
// kernel: tpu_custom_call.1
$region0: #{tpu_custom_call.1}
  #allocation0 [shape = 'u32[]', space=smem, size = 0x4, offset = 0x4, fixed_abs, tag = 'smem constant byte address 0x4 - core index']
  #allocation1 [shape = 'u32[144,128]{1,0:T(1,128)}', space=vmem, size = 0x12000, scoped, tag = 'internal scratch']
  %s0 = inlined_call_operand.vmem [shape: f32[8,3], index: 0, kind: input, shape index: {}]
  %s1 = inlined_call_operand.vmem [shape: s32[8,2], index: 1, kind: input, shape index: {}]
  %s2 = inlined_call_operand.hbm [shape: f32[3,32], index: 2, kind: input, shape index: {}]
  %s3 = inlined_call_operand.vmem [shape: bf16[32,32], index: 3, kind: input, shape index: {}]
  %s4 = inlined_call_operand.hbm [shape: bf16[32,32], index: 4, kind: input, shape index: {}]
  %s5 = inlined_call_operand.hbm [shape: f32[1,32], index: 5, kind: input, shape index: {}]
  %s6 = inlined_call_operand.vmem [shape: bf16[32,128], index: 6, kind: input, shape index: {}]
  %s7 = inlined_call_operand.vmem [shape: f32[1,128], index: 7, kind: input, shape index: {}]
  %s8 = inlined_call_operand.hbm [shape: bf16[8,128], index: 8, kind: output, shape index: {}]
  %s9 = sld [smem:[#allocation0]]
  $region54: #{tpu_custom_call.1} parent=0
    _
  %s11 = ssub.s32 1, %s9
  %s12 = scalar_select 0, %s11, %s9
  $region1: #{tpu_custom_call.1} parent=0
    #allocation2 [shape = 'u8[2048]{0}', space=vmem, size = 0x800, scoped, tag = 'input window, operand 2, single buffered']
    #allocation3 [shape = 's32[1]{0}', space=sflag, size = 0x4, scoped, tag = 'scoped memory for tpu_custom_call.1']
    #allocation4 [shape = 's32[1]{0}', space=sflag, size = 0x4, scoped, tag = 'scoped memory for tpu_custom_call.1']
    #allocation5 [shape = 'u8[8192]{0}', space=vmem, size = 0x2000, scoped, tag = 'input window, operand 4, single buffered']
    #allocation6 [shape = 's32[1]{0}', space=sflag, size = 0x4, scoped, tag = 'scoped memory for tpu_custom_call.1']
    #allocation7 [shape = 'u8[512]{0}', space=vmem, size = 0x400, scoped, tag = 'input window, operand 5, single buffered']
    #allocation8 [shape = 'u8[2048]{0}', space=vmem, size = 0x800, scoped, tag = 'output window, operand 0, single buffered']
    %13 = vsyncpa [#allocation3], 0
    %14 = vsyncpa [#allocation6], 0
    %15 = vsyncpa [#allocation4], 0
    // Predicated region
    $region2: #{tpu_custom_call.1} parent=1 // pred_check
      _
    $region3: #{tpu_custom_call.1} parent=1 // pred_check_branch
      %17 = sbr.rel (0) target = $region5
    $region4: #{tpu_custom_call.1} parent=1 // pred_region
      _
    $region5: #{tpu_custom_call.1} parent=1 // pred_fallthru
      _
    // Predicated region
    $region6: #{tpu_custom_call.1} parent=1 // pred_check
      _
    $region7: #{tpu_custom_call.1} parent=1 // pred_check_branch
      %19 = sbr.rel (0) target = $region9
    $region8: #{tpu_custom_call.1} parent=1 // pred_region
      _
    $region9: #{tpu_custom_call.1} parent=1 // pred_fallthru
      _
    // Predicated region
    $region10: #{tpu_custom_call.1} parent=1 // pred_check
      _
    $region11: #{tpu_custom_call.1} parent=1 // pred_check_branch
      %21 = sbr.rel (0) target = $region13
    $region12: #{tpu_custom_call.1} parent=1 // pred_region
      %s23 = ssub.s32 64, 64
      %24 = vsyncadd [#allocation3], %s23
      %s26 = sshll.u32 [#allocation2], 4
      %s27 = int_to_ptr.vmem [resolvable:$true] %s26
      %29 = dma.hbm_to_vmem [thread:$0]  %s2, 64, %s27, [#allocation3]
    $region13: #{tpu_custom_call.1} parent=1 // pred_fallthru
      _
    // Predicated region
    $region14: #{tpu_custom_call.1} parent=1 // pred_check
      _
    $region15: #{tpu_custom_call.1} parent=1 // pred_check_branch
      %31 = sbr.rel (0) target = $region17
    $region16: #{tpu_custom_call.1} parent=1 // pred_region
      _
    $region17: #{tpu_custom_call.1} parent=1 // pred_fallthru
      _
    // Predicated region
    $region18: #{tpu_custom_call.1} parent=1 // pred_check
      _
    $region19: #{tpu_custom_call.1} parent=1 // pred_check_branch
      %33 = sbr.rel (0) target = $region21
    $region20: #{tpu_custom_call.1} parent=1 // pred_region
      %s35 = ssub.s32 256, 256
      %36 = vsyncadd [#allocation6], %s35
      %s37 = sshll.u32 [#allocation5], 4
      %s38 = int_to_ptr.vmem [resolvable:$true] %s37
      %43 = dma.hbm_to_vmem [thread:$0]  %s4, 256, %s38, [#allocation6], 64, 64, 4
    $region21: #{tpu_custom_call.1} parent=1 // pred_fallthru
      _
    // Predicated region
    $region22: #{tpu_custom_call.1} parent=1 // pred_check
      _
    $region23: #{tpu_custom_call.1} parent=1 // pred_check_branch
      %45 = sbr.rel (0) target = $region25
    $region24: #{tpu_custom_call.1} parent=1 // pred_region
      %s47 = ssub.s32 16, 16
      %48 = vsyncadd [#allocation6], %s47
      %s50 = sshll.u32 [#allocation7], 4
      %s51 = int_to_ptr.vmem [resolvable:$true] %s50
      %53 = dma.hbm_to_vmem [thread:$0]  %s5, 16, %s51, [#allocation6]
    $region25: #{tpu_custom_call.1} parent=1 // pred_fallthru
      _
    // Predicated region
    $region26: #{tpu_custom_call.1} parent=1 // pred_check
      _
    $region27: #{tpu_custom_call.1} parent=1 // pred_check_branch
      %55 = sbr.rel (0) target = $region29
    $region28: #{tpu_custom_call.1} parent=1 // pred_region
      _
    $region29: #{tpu_custom_call.1} parent=1 // pred_fallthru
      _
    // Predicated region
    $region30: #{tpu_custom_call.1} parent=1 // pred_check
      _
    $region31: #{tpu_custom_call.1} parent=1 // pred_check_branch
      %57 = sbr.rel (0) target = $region33
    $region32: #{tpu_custom_call.1} parent=1 // pred_region
      _
    $region33: #{tpu_custom_call.1} parent=1 // pred_fallthru
      _
    // Predicated region
    $region34: #{tpu_custom_call.1} parent=1 // pred_check
      _
    $region35: #{tpu_custom_call.1} parent=1 // pred_check_branch
      %59 = sbr.rel (0) target = $region37
    $region36: #{tpu_custom_call.1} parent=1 // pred_region
      %60 = dma.done [#allocation3], 64
    $region37: #{tpu_custom_call.1} parent=1 // pred_fallthru
      _
    // Predicated region
    $region38: #{tpu_custom_call.1} parent=1 // pred_check
      _
    $region39: #{tpu_custom_call.1} parent=1 // pred_check_branch
      %62 = sbr.rel (0) target = $region41
    $region40: #{tpu_custom_call.1} parent=1 // pred_region
      %63 = dma.done [#allocation6], 256
    $region41: #{tpu_custom_call.1} parent=1 // pred_fallthru
      _
    // Predicated region
    $region42: #{tpu_custom_call.1} parent=1 // pred_check
      _
    $region43: #{tpu_custom_call.1} parent=1 // pred_check_branch
      %65 = sbr.rel (0) target = $region45
    $region44: #{tpu_custom_call.1} parent=1 // pred_region
      %66 = dma.done [#allocation6], 16
    $region45: #{tpu_custom_call.1} parent=1 // pred_fallthru
      _
    %v68 = vlaneseq
    %v69 = vand.u32 %v68, 127
    %v70 = vld [vmem:[%s1] sm:$0xff]
    %71 = vset.pattern.permute.xlu0 0
    %72 = vperm.xlu0 %71, %v70
    %v73 = vpop.permute.xlu0 %72
    %vm74 = vcmp.eq.s32.totalorder %v69, %v73
    %v75 = vsel %vm74, 1, 0
    %v76 = vcvt.s32.f32 %v75
    %v77 = vpack.c.bf16 %v76, %v76
    %v78 = vadd.s32 %v70, 16
    %79 = vset.pattern.permute.xlu0 1
    %80 = vperm.xlu0 %79, %v78
    %v81 = vpop.permute.xlu0 %80
    %vm82 = vcmp.eq.s32.totalorder %v69, %v81
    %v83 = vsel %vm82, 1, 0
    %v84 = vcvt.s32.f32 %v83
    %v85 = vpack.c.bf16 %v84, %v84
    %v86 = vadd.bf16 %v77, %v85
    %v87 = vld [vmem:[%s3] sm:$0xf]
    %v88 = vld [vmem:[%s3 + $0x4] sm:$0xf]
    %v89 = vld [vmem:[%s3 + $0x8] sm:$0xf]
    %v90 = vld [vmem:[%s3 + $0xc] sm:$0xf]
    %v91 = vld [vmem:[%s0] sm:$0xff]
    %v92 = vld [vmem:[#allocation2] sm:$0x1]
    %94 = vset.pattern.permute.xlu0 0
    %95 = vperm.xlu0 %94, %v91
    %v96 = vpop.permute.xlu0 %95
    %v98 = vlaneseq
    %v99 = vshrl.u32 %v98, 7
    %v100 = vsub.s32 0, %v99
    %v101 = vrot.slane %v92, %v100
    %v102 = vmul.f32 %v96, %v101
    %v107 = vunpack.c.l.b16 %v87
    %v108 = vunpack.c.l.b16 %v88
    %v109 = vunpack.c.l.b16 %v89
    %v110 = vunpack.c.l.b16 %v90
    %v111 = vpack.c.b16 %v108, %v107
    %v112 = vpack.c.b16 %v110, %v109
    %vm115 = vcmask 261120
    %v117 = vsel %vm115, %v86, 0
    %119 = vmatprep.subr.bf16.mxu0 0
    %120 = vmatpush1.bf16.msra.mxu0 0
    %121 = vmatprep.subr.bf16.mxu0 0
    %122 = vmatpush1.bf16.msra.mxu0 0
    %123 = vmatprep.subr.bf16.mxu0 0
    %124 = vmatpush1.bf16.msra.mxu0 0
    %125 = vmatprep.subr.bf16.mxu0 0
    %126 = vmatpush1.bf16.msra.mxu0 0
    %127 = vmatprep.subr.bf16.mxu0 0
    %128 = vmatpush1.bf16.msra.mxu0 0
    %129 = vmatprep.subr.bf16.mxu0 0
    %130 = vmatpush1.bf16.msra.mxu0 0
    %131 = vmatprep.subr.bf16.mxu0 0
    %132 = vmatpush1.bf16.msra.mxu0 %v112
    %133 = vmatprep.subr.bf16.mxu0 0
    %134 = vmatpush1.bf16.msra.mxu0 %v111
    %135 = vmatprep.subr.bf16.mxu0 0
    %136 = vmatpush2.bf16.msra.mxu0 0
    %137 = vmatprep.subr.bf16.mxu0 0
    %138 = vmatpush2.bf16.msra.mxu0 0
    %139 = vmatprep.subr.bf16.mxu0 0
    %140 = vmatpush2.bf16.msra.mxu0 0
    %141 = vmatprep.subr.bf16.mxu0 0
    %142 = vmatpush2.bf16.msra.mxu0 0
    %143 = vmatprep.subr.bf16.mxu0 0
    %144 = vmatpush2.bf16.msra.mxu0 0
    %145 = vmatprep.subr.bf16.mxu0 0
    %146 = vmatpush2.bf16.msra.mxu0 0
    %147 = vmatprep.subr.bf16.mxu0 0
    %148 = vmatpush2.bf16.msra.mxu0 0
    %149 = vmatprep.subr.bf16.mxu0 0
    %150 = vmatpush2.bf16.msra.mxu0 0
    %151 = vmatprep.mubr.bf16.mxu0 0
    %152 = vmatmul.mubr.bf16.gmra.mxu0 %v117
    %v153 = vpop.f32.mrf.mxu0
    %v154 = vadd.f32 %v102, %v153
    %v155 = vpop.f32.mrf.mxu0
    %v156 = vpop.f32.mrf.mxu0
    %v157 = vpop.f32.mrf.mxu0
    %158 = vdwg.mxu0
    %v159 = vld [vmem:[#allocation2 + $0x1] sm:$0x1]
    %160 = vset.pattern.permute.xlu0 1
    %161 = vperm.xlu0 %160, %v91
    %v162 = vpop.permute.xlu0 %161
    %v164 = vlaneseq
    %v165 = vshrl.u32 %v164, 7
    %v166 = vsub.s32 0, %v165
    %v167 = vrot.slane %v159, %v166
    %v168 = vmul.f32 %v162, %v167
    %v169 = vadd.f32 %v154, %v168
    %v170 = vld [vmem:[#allocation2 + $0x2] sm:$0x1]
    %171 = vset.pattern.permute.xlu0 2
    %172 = vperm.xlu0 %171, %v91
    %v173 = vpop.permute.xlu0 %172
    %v175 = vlaneseq
    %v176 = vshrl.u32 %v175, 7
    %v177 = vsub.s32 0, %v176
    %v178 = vrot.slane %v170, %v177
    %v179 = vmul.f32 %v173, %v178
    %v180 = vadd.f32 %v169, %v179
    %v181 = vmul.f32 %v180, 0.2
    %v182 = vpack.c.bf16 %v181, %v181
    %v183 = vld [vmem:[#allocation5] sm:$0xf]
    %v184 = vld [vmem:[#allocation5 + $0x4] sm:$0xf]
    %v185 = vld [vmem:[#allocation5 + $0x8] sm:$0xf]
    %v186 = vld [vmem:[#allocation5 + $0xc] sm:$0xf]
    %v187 = vld [vmem:[#allocation7] sm:$0x1]
    %v189 = vlaneseq
    %v190 = vshrl.u32 %v189, 7
    %v191 = vsub.s32 0, %v190
    %v192 = vrot.slane %v187, %v191
    %v198 = vunpack.c.l.b16 %v183
    %v199 = vunpack.c.l.b16 %v184
    %v200 = vunpack.c.l.b16 %v185
    %v201 = vunpack.c.l.b16 %v186
    %v202 = vpack.c.b16 %v199, %v198
    %v203 = vpack.c.b16 %v201, %v200
    %v207 = vsel %vm115, %v182, 0
    %209 = vmatprep.subr.bf16.mxu0 0
    %210 = vmatpush1.bf16.msra.mxu0 0
    %211 = vmatprep.subr.bf16.mxu0 0
    %212 = vmatpush1.bf16.msra.mxu0 0
    %213 = vmatprep.subr.bf16.mxu0 0
    %214 = vmatpush1.bf16.msra.mxu0 0
    %215 = vmatprep.subr.bf16.mxu0 0
    %216 = vmatpush1.bf16.msra.mxu0 0
    %217 = vmatprep.subr.bf16.mxu0 0
    %218 = vmatpush1.bf16.msra.mxu0 0
    %219 = vmatprep.subr.bf16.mxu0 0
    %220 = vmatpush1.bf16.msra.mxu0 0
    %221 = vmatprep.subr.bf16.mxu0 0
    %222 = vmatpush1.bf16.msra.mxu0 %v203
    %223 = vmatprep.subr.bf16.mxu0 0
    %224 = vmatpush1.bf16.msra.mxu0 %v202
    %225 = vmatprep.subr.bf16.mxu0 0
    %226 = vmatpush2.bf16.msra.mxu0 0
    %227 = vmatprep.subr.bf16.mxu0 0
    %228 = vmatpush2.bf16.msra.mxu0 0
    %229 = vmatprep.subr.bf16.mxu0 0
    %230 = vmatpush2.bf16.msra.mxu0 0
    %231 = vmatprep.subr.bf16.mxu0 0
    %232 = vmatpush2.bf16.msra.mxu0 0
    %233 = vmatprep.subr.bf16.mxu0 0
    %234 = vmatpush2.bf16.msra.mxu0 0
    %235 = vmatprep.subr.bf16.mxu0 0
    %236 = vmatpush2.bf16.msra.mxu0 0
    %237 = vmatprep.subr.bf16.mxu0 0
    %238 = vmatpush2.bf16.msra.mxu0 0
    %239 = vmatprep.subr.bf16.mxu0 0
    %240 = vmatpush2.bf16.msra.mxu0 0
    %241 = vmatprep.mubr.bf16.mxu0 0
    %242 = vmatmul.mubr.bf16.gmra.mxu0 %v207
    %v243 = vpop.f32.mrf.mxu0
    %v244 = vadd.f32 %v192, %v243
    %v245 = vpop.f32.mrf.mxu0
    %v246 = vpop.f32.mrf.mxu0
    %v247 = vpop.f32.mrf.mxu0
    %248 = vdwg.mxu0
    %v249 = vmax.f32 %v244, 0.0
    %v250 = vpack.c.bf16 %v249, %v249
    %v251 = vld [vmem:[%s6] sm:$0xf]
    %v252 = vld [vmem:[%s6 + $0x4] sm:$0xf]
    %v253 = vld [vmem:[%s6 + $0x8] sm:$0xf]
    %v254 = vld [vmem:[%s6 + $0xc] sm:$0xf]
    %v255 = vld [vmem:[%s7] sm:$0x1]
    %v257 = vlaneseq
    %v258 = vshrl.u32 %v257, 7
    %v259 = vsub.s32 0, %v258
    %v260 = vrot.slane %v255, %v259
    %v266 = vunpack.c.l.b16 %v251
    %v267 = vunpack.c.l.b16 %v252
    %v268 = vunpack.c.l.b16 %v253
    %v269 = vunpack.c.l.b16 %v254
    %v270 = vpack.c.b16 %v267, %v266
    %v271 = vpack.c.b16 %v269, %v268
    %v275 = vsel %vm115, %v250, 0
    %277 = vmatprep.subr.bf16.mxu0 0
    %278 = vmatpush1.bf16.msra.mxu0 0
    %279 = vmatprep.subr.bf16.mxu0 0
    %280 = vmatpush1.bf16.msra.mxu0 0
    %281 = vmatprep.subr.bf16.mxu0 0
    %282 = vmatpush1.bf16.msra.mxu0 0
    %283 = vmatprep.subr.bf16.mxu0 0
    %284 = vmatpush1.bf16.msra.mxu0 0
    %285 = vmatprep.subr.bf16.mxu0 0
    %286 = vmatpush1.bf16.msra.mxu0 0
    %287 = vmatprep.subr.bf16.mxu0 0
    %288 = vmatpush1.bf16.msra.mxu0 0
    %289 = vmatprep.subr.bf16.mxu0 0
    %290 = vmatpush1.bf16.msra.mxu0 %v271
    %291 = vmatprep.subr.bf16.mxu0 0
    %292 = vmatpush1.bf16.msra.mxu0 %v270
    %293 = vmatprep.subr.bf16.mxu0 0
    %294 = vmatpush2.bf16.msra.mxu0 0
    %295 = vmatprep.subr.bf16.mxu0 0
    %296 = vmatpush2.bf16.msra.mxu0 0
    %297 = vmatprep.subr.bf16.mxu0 0
    %298 = vmatpush2.bf16.msra.mxu0 0
    %299 = vmatprep.subr.bf16.mxu0 0
    %300 = vmatpush2.bf16.msra.mxu0 0
    %301 = vmatprep.subr.bf16.mxu0 0
    %302 = vmatpush2.bf16.msra.mxu0 0
    %303 = vmatprep.subr.bf16.mxu0 0
    %304 = vmatpush2.bf16.msra.mxu0 0
    %305 = vmatprep.subr.bf16.mxu0 0
    %306 = vmatpush2.bf16.msra.mxu0 0
    %307 = vmatprep.subr.bf16.mxu0 0
    %308 = vmatpush2.bf16.msra.mxu0 0
    %309 = vmatprep.mubr.bf16.mxu0 0
    %310 = vmatmul.mubr.bf16.gmra.mxu0 %v275
    %v311 = vpop.f32.mrf.mxu0
    %v312 = vadd.f32 %v260, %v311
    %v313 = vpop.f32.mrf.mxu0
    %v314 = vpop.f32.mrf.mxu0
    %v315 = vpop.f32.mrf.mxu0
    %316 = vdwg.mxu0
    %v317 = vpack.c.bf16 %v312, %v312
    %318 = vst [vmem:[#allocation8] sm:$0xf] %v317
    // Predicated region
    $region46: #{tpu_custom_call.1} parent=1 // pred_check
      _
    $region47: #{tpu_custom_call.1} parent=1 // pred_check_branch
      %320 = sbr.rel (0) target = $region49
    $region48: #{tpu_custom_call.1} parent=1 // pred_region
      %s322 = ssub.s32 64, 64
      %323 = vsyncadd [#allocation4], %s322
      %s325 = sshll.u32 [#allocation8], 4
      %s326 = int_to_ptr.vmem [resolvable:$true] %s325
      %328 = dma.vmem_to_hbm [thread:$0]  %s326, 64, %s8, [#allocation4]
    $region49: #{tpu_custom_call.1} parent=1 // pred_fallthru
      _
    // Predicated region
    $region50: #{tpu_custom_call.1} parent=1 // pred_check
      _
    $region51: #{tpu_custom_call.1} parent=1 // pred_check_branch
      %330 = sbr.rel (0) target = $region53
    $region52: #{tpu_custom_call.1} parent=1 // pred_region
      %331 = dma.done [#allocation4], 64
    $region53: #{tpu_custom_call.1} parent=1 // pred_fallthru
      _
    %332 = vsyncpa [#allocation3], 1
    %333 = vsyncpa [#allocation6], 1
    %334 = vsyncpa [#allocation4], 1

// kernel: tpu_custom_call.1
$region0: #{tpu_custom_call.1}
  #allocation0 [shape = 'u32[]', space=smem, size = 0x4, offset = 0x4, fixed_abs, tag = 'smem constant byte address 0x4 - core index']
  #allocation1 [shape = 'u32[144,128]{1,0:T(1,128)}', space=vmem, size = 0x12000, scoped, tag = 'internal scratch']
  %s0 = inlined_call_operand.vmem [shape: f32[8,3], index: 0, kind: input, shape index: {}]
  %s1 = inlined_call_operand.vmem [shape: s32[8,2], index: 1, kind: input, shape index: {}]
  %s2 = inlined_call_operand.hbm [shape: f32[3,32], index: 2, kind: input, shape index: {}]
  %s3 = inlined_call_operand.vmem [shape: bf16[32,32], index: 3, kind: input, shape index: {}]
  %s4 = inlined_call_operand.hbm [shape: bf16[32,32], index: 4, kind: input, shape index: {}]
  %s5 = inlined_call_operand.hbm [shape: f32[1,32], index: 5, kind: input, shape index: {}]
  %s6 = inlined_call_operand.vmem [shape: bf16[32,128], index: 6, kind: input, shape index: {}]
  %s7 = inlined_call_operand.vmem [shape: f32[1,128], index: 7, kind: input, shape index: {}]
  %s8 = inlined_call_operand.hbm [shape: bf16[8,128], index: 8, kind: output, shape index: {}]
  %s9 = sld [smem:[#allocation0]]
  $region54: #{tpu_custom_call.1} parent=0
    _
  %s11 = ssub.s32 1, %s9
  %s12 = scalar_select 0, %s11, %s9
  $region1: #{tpu_custom_call.1} parent=0
    #allocation2 [shape = 'u8[2048]{0}', space=vmem, size = 0x800, scoped, tag = 'input window, operand 2, single buffered']
    #allocation3 [shape = 's32[1]{0}', space=sflag, size = 0x4, scoped, tag = 'scoped memory for tpu_custom_call.1']
    #allocation4 [shape = 's32[1]{0}', space=sflag, size = 0x4, scoped, tag = 'scoped memory for tpu_custom_call.1']
    #allocation5 [shape = 'u8[8192]{0}', space=vmem, size = 0x2000, scoped, tag = 'input window, operand 4, single buffered']
    #allocation6 [shape = 's32[1]{0}', space=sflag, size = 0x4, scoped, tag = 'scoped memory for tpu_custom_call.1']
    #allocation7 [shape = 'u8[512]{0}', space=vmem, size = 0x400, scoped, tag = 'input window, operand 5, single buffered']
    #allocation8 [shape = 'u8[2048]{0}', space=vmem, size = 0x800, scoped, tag = 'output window, operand 0, single buffered']
    %13 = vsyncpa [#allocation3], 0
    %14 = vsyncpa [#allocation6], 0
    %15 = vsyncpa [#allocation4], 0
    // Predicated region
    $region2: #{tpu_custom_call.1} parent=1 // pred_check
      _
    $region3: #{tpu_custom_call.1} parent=1 // pred_check_branch
      %17 = sbr.rel (0) target = $region5
    $region4: #{tpu_custom_call.1} parent=1 // pred_region
      _
    $region5: #{tpu_custom_call.1} parent=1 // pred_fallthru
      _
    // Predicated region
    $region6: #{tpu_custom_call.1} parent=1 // pred_check
      _
    $region7: #{tpu_custom_call.1} parent=1 // pred_check_branch
      %19 = sbr.rel (0) target = $region9
    $region8: #{tpu_custom_call.1} parent=1 // pred_region
      _
    $region9: #{tpu_custom_call.1} parent=1 // pred_fallthru
      _
    // Predicated region
    $region10: #{tpu_custom_call.1} parent=1 // pred_check
      _
    $region11: #{tpu_custom_call.1} parent=1 // pred_check_branch
      %21 = sbr.rel (0) target = $region13
    $region12: #{tpu_custom_call.1} parent=1 // pred_region
      %s23 = ssub.s32 64, 64
      %24 = vsyncadd [#allocation3], %s23
      %s26 = sshll.u32 [#allocation2], 4
      %s27 = int_to_ptr.vmem [resolvable:$true] %s26
      %29 = dma.hbm_to_vmem [thread:$0]  %s2, 64, %s27, [#allocation3]
    $region13: #{tpu_custom_call.1} parent=1 // pred_fallthru
      _
    // Predicated region
    $region14: #{tpu_custom_call.1} parent=1 // pred_check
      _
    $region15: #{tpu_custom_call.1} parent=1 // pred_check_branch
      %31 = sbr.rel (0) target = $region17
    $region16: #{tpu_custom_call.1} parent=1 // pred_region
      _
    $region17: #{tpu_custom_call.1} parent=1 // pred_fallthru
      _
    // Predicated region
    $region18: #{tpu_custom_call.1} parent=1 // pred_check
      _
    $region19: #{tpu_custom_call.1} parent=1 // pred_check_branch
      %33 = sbr.rel (0) target = $region21
    $region20: #{tpu_custom_call.1} parent=1 // pred_region
      %s35 = ssub.s32 256, 256
      %36 = vsyncadd [#allocation6], %s35
      %s37 = sshll.u32 [#allocation5], 4
      %s38 = int_to_ptr.vmem [resolvable:$true] %s37
      %43 = dma.hbm_to_vmem [thread:$0]  %s4, 256, %s38, [#allocation6], 64, 64, 4
    $region21: #{tpu_custom_call.1} parent=1 // pred_fallthru
      _
    // Predicated region
    $region22: #{tpu_custom_call.1} parent=1 // pred_check
      _
    $region23: #{tpu_custom_call.1} parent=1 // pred_check_branch
      %45 = sbr.rel (0) target = $region25
    $region24: #{tpu_custom_call.1} parent=1 // pred_region
      %s47 = ssub.s32 16, 16
      %48 = vsyncadd [#allocation6], %s47
      %s50 = sshll.u32 [#allocation7], 4
      %s51 = int_to_ptr.vmem [resolvable:$true] %s50
      %53 = dma.hbm_to_vmem [thread:$0]  %s5, 16, %s51, [#allocation6]
    $region25: #{tpu_custom_call.1} parent=1 // pred_fallthru
      _
    // Predicated region
    $region26: #{tpu_custom_call.1} parent=1 // pred_check
      _
    $region27: #{tpu_custom_call.1} parent=1 // pred_check_branch
      %55 = sbr.rel (0) target = $region29
    $region28: #{tpu_custom_call.1} parent=1 // pred_region
      _
    $region29: #{tpu_custom_call.1} parent=1 // pred_fallthru
      _
    // Predicated region
    $region30: #{tpu_custom_call.1} parent=1 // pred_check
      _
    $region31: #{tpu_custom_call.1} parent=1 // pred_check_branch
      %57 = sbr.rel (0) target = $region33
    $region32: #{tpu_custom_call.1} parent=1 // pred_region
      _
    $region33: #{tpu_custom_call.1} parent=1 // pred_fallthru
      _
    // Predicated region
    $region34: #{tpu_custom_call.1} parent=1 // pred_check
      _
    $region35: #{tpu_custom_call.1} parent=1 // pred_check_branch
      %59 = sbr.rel (0) target = $region37
    $region36: #{tpu_custom_call.1} parent=1 // pred_region
      %60 = dma.done [#allocation3], 64
    $region37: #{tpu_custom_call.1} parent=1 // pred_fallthru
      _
    // Predicated region
    $region38: #{tpu_custom_call.1} parent=1 // pred_check
      _
    $region39: #{tpu_custom_call.1} parent=1 // pred_check_branch
      %62 = sbr.rel (0) target = $region41
    $region40: #{tpu_custom_call.1} parent=1 // pred_region
      %63 = dma.done [#allocation6], 256
    $region41: #{tpu_custom_call.1} parent=1 // pred_fallthru
      _
    // Predicated region
    $region42: #{tpu_custom_call.1} parent=1 // pred_check
      _
    $region43: #{tpu_custom_call.1} parent=1 // pred_check_branch
      %65 = sbr.rel (0) target = $region45
    $region44: #{tpu_custom_call.1} parent=1 // pred_region
      %66 = dma.done [#allocation6], 16
    $region45: #{tpu_custom_call.1} parent=1 // pred_fallthru
      _
    %v68 = vlaneseq
    %v69 = vand.u32 %v68, 127
    %v70 = vld [vmem:[%s1] sm:$0xff]
    %71 = vset.pattern.permute.xlu0 0
    %72 = vperm.xlu0 %71, %v70
    %v73 = vpop.permute.xlu0 %72
    %vm74 = vcmp.eq.s32.totalorder %v69, %v73
    %v75 = vsel %vm74, 1, 0
    %v76 = vcvt.s32.f32 %v75
    %v77 = vpack.c.bf16 %v76, %v76
    %v78 = vadd.s32 %v70, 16
    %79 = vset.pattern.permute.xlu0 1
    %80 = vperm.xlu0 %79, %v78
    %v81 = vpop.permute.xlu0 %80
    %vm82 = vcmp.eq.s32.totalorder %v69, %v81
    %v83 = vsel %vm82, 1, 0
    %v84 = vcvt.s32.f32 %v83
    %v85 = vpack.c.bf16 %v84, %v84
    %v86 = vadd.bf16 %v77, %v85
    %v87 = vld [vmem:[%s3] sm:$0xf]
    %v88 = vld [vmem:[%s3 + $0x4] sm:$0xf]
    %v89 = vld [vmem:[%s3 + $0x8] sm:$0xf]
    %v90 = vld [vmem:[%s3 + $0xc] sm:$0xf]
    %v91 = vld [vmem:[%s0] sm:$0xff]
    %v92 = vld [vmem:[#allocation2] sm:$0x1]
    %94 = vset.pattern.permute.xlu0 0
    %95 = vperm.xlu0 %94, %v91
    %v96 = vpop.permute.xlu0 %95
    %v98 = vlaneseq
    %v99 = vshrl.u32 %v98, 7
    %v100 = vsub.s32 0, %v99
    %v101 = vrot.slane %v92, %v100
    %v102 = vmul.f32 %v96, %v101
    %v107 = vunpack.c.l.b16 %v87
    %v108 = vunpack.c.l.b16 %v88
    %v109 = vunpack.c.l.b16 %v89
    %v110 = vunpack.c.l.b16 %v90
    %v111 = vpack.c.b16 %v108, %v107
    %v112 = vpack.c.b16 %v110, %v109
    %vm115 = vcmask 261120
    %v117 = vsel %vm115, %v86, 0
    %119 = vmatprep.subr.bf16.mxu0 0
    %120 = vmatpush1.bf16.msra.mxu0 0
    %121 = vmatprep.subr.bf16.mxu0 0
    %122 = vmatpush1.bf16.msra.mxu0 0
    %123 = vmatprep.subr.bf16.mxu0 0
    %124 = vmatpush1.bf16.msra.mxu0 0
    %125 = vmatprep.subr.bf16.mxu0 0
    %126 = vmatpush1.bf16.msra.mxu0 0
    %127 = vmatprep.subr.bf16.mxu0 0
    %128 = vmatpush1.bf16.msra.mxu0 0
    %129 = vmatprep.subr.bf16.mxu0 0
    %130 = vmatpush1.bf16.msra.mxu0 0
    %131 = vmatprep.subr.bf16.mxu0 0
    %132 = vmatpush1.bf16.msra.mxu0 %v112
    %133 = vmatprep.subr.bf16.mxu0 0
    %134 = vmatpush1.bf16.msra.mxu0 %v111
    %135 = vmatprep.subr.bf16.mxu0 0
    %136 = vmatpush2.bf16.msra.mxu0 0
    %137 = vmatprep.subr.bf16.mxu0 0
    %138 = vmatpush2.bf16.msra.mxu0 0
    %139 = vmatprep.subr.bf16.mxu0 0
    %140 = vmatpush2.bf16.msra.mxu0 0
    %141 = vmatprep.subr.bf16.mxu0 0
    %142 = vmatpush2.bf16.msra.mxu0 0
    %143 = vmatprep.subr.bf16.mxu0 0
    %144 = vmatpush2.bf16.msra.mxu0 0
    %145 = vmatprep.subr.bf16.mxu0 0
    %146 = vmatpush2.bf16.msra.mxu0 0
    %147 = vmatprep.subr.bf16.mxu0 0
    %148 = vmatpush2.bf16.msra.mxu0 0
    %149 = vmatprep.subr.bf16.mxu0 0
    %150 = vmatpush2.bf16.msra.mxu0 0
    %151 = vmatprep.mubr.bf16.mxu0 0
    %152 = vmatmul.mubr.bf16.gmra.mxu0 %v117
    %v153 = vpop.f32.mrf.mxu0
    %v154 = vadd.f32 %v102, %v153
    %v155 = vpop.f32.mrf.mxu0
    %v156 = vpop.f32.mrf.mxu0
    %v157 = vpop.f32.mrf.mxu0
    %158 = vdwg.mxu0
    %v159 = vld [vmem:[#allocation2 + $0x1] sm:$0x1]
    %160 = vset.pattern.permute.xlu0 1
    %161 = vperm.xlu0 %160, %v91
    %v162 = vpop.permute.xlu0 %161
    %v164 = vlaneseq
    %v165 = vshrl.u32 %v164, 7
    %v166 = vsub.s32 0, %v165
    %v167 = vrot.slane %v159, %v166
    %v168 = vmul.f32 %v162, %v167
    %v169 = vadd.f32 %v154, %v168
    %v170 = vld [vmem:[#allocation2 + $0x2] sm:$0x1]
    %171 = vset.pattern.permute.xlu0 2
    %172 = vperm.xlu0 %171, %v91
    %v173 = vpop.permute.xlu0 %172
    %v175 = vlaneseq
    %v176 = vshrl.u32 %v175, 7
    %v177 = vsub.s32 0, %v176
    %v178 = vrot.slane %v170, %v177
    %v179 = vmul.f32 %v173, %v178
    %v180 = vadd.f32 %v169, %v179
    %v181 = vmul.f32 %v180, 0.2
    %v182 = vpack.c.bf16 %v181, %v181
    %v183 = vld [vmem:[#allocation5] sm:$0xf]
    %v184 = vld [vmem:[#allocation5 + $0x4] sm:$0xf]
    %v185 = vld [vmem:[#allocation5 + $0x8] sm:$0xf]
    %v186 = vld [vmem:[#allocation5 + $0xc] sm:$0xf]
    %v187 = vld [vmem:[#allocation7] sm:$0x1]
    %v189 = vlaneseq
    %v190 = vshrl.u32 %v189, 7
    %v191 = vsub.s32 0, %v190
    %v192 = vrot.slane %v187, %v191
    %v198 = vunpack.c.l.b16 %v183
    %v199 = vunpack.c.l.b16 %v184
    %v200 = vunpack.c.l.b16 %v185
    %v201 = vunpack.c.l.b16 %v186
    %v202 = vpack.c.b16 %v199, %v198
    %v203 = vpack.c.b16 %v201, %v200
    %v207 = vsel %vm115, %v182, 0
    %209 = vmatprep.subr.bf16.mxu0 0
    %210 = vmatpush1.bf16.msra.mxu0 0
    %211 = vmatprep.subr.bf16.mxu0 0
    %212 = vmatpush1.bf16.msra.mxu0 0
    %213 = vmatprep.subr.bf16.mxu0 0
    %214 = vmatpush1.bf16.msra.mxu0 0
    %215 = vmatprep.subr.bf16.mxu0 0
    %216 = vmatpush1.bf16.msra.mxu0 0
    %217 = vmatprep.subr.bf16.mxu0 0
    %218 = vmatpush1.bf16.msra.mxu0 0
    %219 = vmatprep.subr.bf16.mxu0 0
    %220 = vmatpush1.bf16.msra.mxu0 0
    %221 = vmatprep.subr.bf16.mxu0 0
    %222 = vmatpush1.bf16.msra.mxu0 %v203
    %223 = vmatprep.subr.bf16.mxu0 0
    %224 = vmatpush1.bf16.msra.mxu0 %v202
    %225 = vmatprep.subr.bf16.mxu0 0
    %226 = vmatpush2.bf16.msra.mxu0 0
    %227 = vmatprep.subr.bf16.mxu0 0
    %228 = vmatpush2.bf16.msra.mxu0 0
    %229 = vmatprep.subr.bf16.mxu0 0
    %230 = vmatpush2.bf16.msra.mxu0 0
    %231 = vmatprep.subr.bf16.mxu0 0
    %232 = vmatpush2.bf16.msra.mxu0 0
    %233 = vmatprep.subr.bf16.mxu0 0
    %234 = vmatpush2.bf16.msra.mxu0 0
    %235 = vmatprep.subr.bf16.mxu0 0
    %236 = vmatpush2.bf16.msra.mxu0 0
    %237 = vmatprep.subr.bf16.mxu0 0
    %238 = vmatpush2.bf16.msra.mxu0 0
    %239 = vmatprep.subr.bf16.mxu0 0
    %240 = vmatpush2.bf16.msra.mxu0 0
    %241 = vmatprep.mubr.bf16.mxu0 0
    %242 = vmatmul.mubr.bf16.gmra.mxu0 %v207
    %v243 = vpop.f32.mrf.mxu0
    %v244 = vadd.f32 %v192, %v243
    %v245 = vpop.f32.mrf.mxu0
    %v246 = vpop.f32.mrf.mxu0
    %v247 = vpop.f32.mrf.mxu0
    %248 = vdwg.mxu0
    %v249 = vmax.f32 %v244, 0.0
    %v250 = vpack.c.bf16 %v249, %v249
    %v251 = vld [vmem:[%s6] sm:$0xf]
    %v252 = vld [vmem:[%s6 + $0x4] sm:$0xf]
    %v253 = vld [vmem:[%s6 + $0x8] sm:$0xf]
    %v254 = vld [vmem:[%s6 + $0xc] sm:$0xf]
    %v255 = vld [vmem:[%s7] sm:$0x1]
    %v257 = vlaneseq
    %v258 = vshrl.u32 %v257, 7
    %v259 = vsub.s32 0, %v258
    %v260 = vrot.slane %v255, %v259
    %v266 = vunpack.c.l.b16 %v251
    %v267 = vunpack.c.l.b16 %v252
    %v268 = vunpack.c.l.b16 %v253
    %v269 = vunpack.c.l.b16 %v254
    %v270 = vpack.c.b16 %v267, %v266
    %v271 = vpack.c.b16 %v269, %v268
    %v275 = vsel %vm115, %v250, 0
    %277 = vmatprep.subr.bf16.mxu0 0
    %278 = vmatpush1.bf16.msra.mxu0 0
    %279 = vmatprep.subr.bf16.mxu0 0
    %280 = vmatpush1.bf16.msra.mxu0 0
    %281 = vmatprep.subr.bf16.mxu0 0
    %282 = vmatpush1.bf16.msra.mxu0 0
    %283 = vmatprep.subr.bf16.mxu0 0
    %284 = vmatpush1.bf16.msra.mxu0 0
    %285 = vmatprep.subr.bf16.mxu0 0
    %286 = vmatpush1.bf16.msra.mxu0 0
    %287 = vmatprep.subr.bf16.mxu0 0
    %288 = vmatpush1.bf16.msra.mxu0 0
    %289 = vmatprep.subr.bf16.mxu0 0
    %290 = vmatpush1.bf16.msra.mxu0 %v271
    %291 = vmatprep.subr.bf16.mxu0 0
    %292 = vmatpush1.bf16.msra.mxu0 %v270
    %293 = vmatprep.subr.bf16.mxu0 0
    %294 = vmatpush2.bf16.msra.mxu0 0
    %295 = vmatprep.subr.bf16.mxu0 0
    %296 = vmatpush2.bf16.msra.mxu0 0
    %297 = vmatprep.subr.bf16.mxu0 0
    %298 = vmatpush2.bf16.msra.mxu0 0
    %299 = vmatprep.subr.bf16.mxu0 0
    %300 = vmatpush2.bf16.msra.mxu0 0
    %301 = vmatprep.subr.bf16.mxu0 0
    %302 = vmatpush2.bf16.msra.mxu0 0
    %303 = vmatprep.subr.bf16.mxu0 0
    %304 = vmatpush2.bf16.msra.mxu0 0
    %305 = vmatprep.subr.bf16.mxu0 0
    %306 = vmatpush2.bf16.msra.mxu0 0
    %307 = vmatprep.subr.bf16.mxu0 0
    %308 = vmatpush2.bf16.msra.mxu0 0
    %309 = vmatprep.mubr.bf16.mxu0 0
    %310 = vmatmul.mubr.bf16.gmra.mxu0 %v275
    %v311 = vpop.f32.mrf.mxu0
    %v312 = vadd.f32 %v260, %v311
    %v313 = vpop.f32.mrf.mxu0
    %v314 = vpop.f32.mrf.mxu0
    %v315 = vpop.f32.mrf.mxu0
    %316 = vdwg.mxu0
    %v317 = vpack.c.bf16 %v312, %v312
    %318 = vst [vmem:[#allocation8] sm:$0xf] %v317
    // Predicated region
    $region46: #{tpu_custom_call.1} parent=1 // pred_check
      _
    $region47: #{tpu_custom_call.1} parent=1 // pred_check_branch
      %320 = sbr.rel (0) target = $region49
    $region48: #{tpu_custom_call.1} parent=1 // pred_region
      %s322 = ssub.s32 64, 64
      %323 = vsyncadd [#allocation4], %s322
      %s325 = sshll.u32 [#allocation8], 4
      %s326 = int_to_ptr.vmem [resolvable:$true] %s325
      %328 = dma.vmem_to_hbm [thread:$0]  %s326, 64, %s8, [#allocation4]
    $region49: #{tpu_custom_call.1} parent=1 // pred_fallthru
      _
    // Predicated region
    $region50: #{tpu_custom_call.1} parent=1 // pred_check
      _
    $region51: #{tpu_custom_call.1} parent=1 // pred_check_branch
      %330 = sbr.rel (0) target = $region53
    $region52: #{tpu_custom_call.1} parent=1 // pred_region
      %331 = dma.done [#allocation4], 64
    $region53: #{tpu_custom_call.1} parent=1 // pred_fallthru
      _
    %332 = vsyncpa [#allocation3], 1
    %333 = vsyncpa [#allocation6], 1
    %334 = vsyncpa [#allocation4], 1

</llo_original>
